<compile_context>
chip_gen: v7x
topology: tpu7x:2x2x1
jax: 0.10.0
libtpu: 0.0.40
codegen_flags: <defaults>
</compile_context>

<pallas_src>
import jax
import jax.numpy as jnp
from jax.experimental import pallas as pl
from jax.experimental.pallas import tpu as pltpu

_LANE = 128
_SUBLANE = 8


def _round_up(x, m):
    return ((x + m - 1) // m) * m


def _num_tensorcores():
    # v7x exposes 2 TensorCores per chip; v4 is megacore.  Elsewhere: 1.
    try:
        kind = jax.devices()[0].device_kind.lower()
        if "v7" in kind or "v4" in kind:
            return 2
    except Exception:
        pass
    return 1


def _multihead_fused_kernel(x_ref, w_ref, b_ref, o_ref, acc_ref):
    # x_ref: (TB, TK), w_ref: (TK, TN), b_ref: (1, TN), o_ref: (TB, TN)
    # acc_ref: (TB, TN) f32 scratch, carried across the K (reduction) axis.
    k = pl.program_id(2)

    @pl.when(k == 0)
    def _():
        acc_ref[...] = jnp.zeros_like(acc_ref)

    xv = x_ref[...]
    wv = w_ref[...]
    if xv.dtype != wv.dtype:
        # bf16 weight path: feed the MXU in the weights' dtype, accumulate f32.
        xv = xv.astype(wv.dtype)
    acc_ref[...] += jnp.dot(xv, wv, preferred_element_type=jnp.float32)

    @pl.when(k == pl.num_programs(2) - 1)
    def _():
        o_ref[...] = (acc_ref[...] + b_ref[...].astype(jnp.float32)).astype(o_ref.dtype)


def _choose_tiles(B, D_in, N_pad, x_bytes, w_bytes, o_bytes, num_cores):
    # K tile: full D_in when small; otherwise a multiple-of-128 divisor so the
    # reduction axis is never ragged (a ragged K block would fold garbage into
    # the accumulator).
    tk = D_in
    if D_in > 1024:
        for cand in (2048, 1024, 512, 384, 256, 128):
            if D_in % cand == 0:
                tk = cand
                break

    # Batch tile: one full tile when it fits; on multi-TC chips split into
    # >= 2 tiles so the "parallel" batch axis gives the second core work.
    cap_b = 512
    if B <= cap_b and not (num_cores > 1 and B >= 16):
        tb = B
    else:
        parts = num_cores if (num_cores > 1 and B >= 16) else 1
        parts = max(parts, pl.cdiv(B, cap_b))
        tb = min(cap_b, _round_up(pl.cdiv(B, parts), _SUBLANE))
        if tb >= B:
            tb = B

    # N tile (N_pad is always a multiple of 128).
    tn = min(N_pad, 1024)

    def need(tb_, tn_, tk_):
        return (2 * tb_ * tk_ * x_bytes          # x tiles, double buffered
                + 2 * tk_ * tn_ * w_bytes        # W tiles
                + 2 * _SUBLANE * tn_ * 4         # bias (sublane-padded)
                + 2 * tb_ * tn_ * o_bytes        # output tiles
                + tb_ * tn_ * 4)                 # f32 accumulator scratch

    budget = 24 << 20
    while need(tb, tn, tk) > budget and tn > _LANE:
        tn = max(_LANE, tn // 2)
    while need(tb, tn, tk) > budget and tb > _SUBLANE:
        tb = max(_SUBLANE, _round_up(tb // 2, _SUBLANE))
    return tb, tn, tk, need(tb, tn, tk)


def multihead_fused(x2d, w_cat, b_cat):
    """Apply all fused affine heads to x2d in one pallas_call.

    x2d:   [B, D_in]
    w_cat: [D_in, N_pad]  (N_pad a multiple of 128)
    b_cat: [1, N_pad]     (float32)
    returns [B, N_pad]    (lane-dense; the wrapper slices per head)
    """
    B, D_in = x2d.shape
    N_pad = w_cat.shape[1]
    out_dtype = x2d.dtype

    num_cores = _num_tensorcores()
    tb, tn, tk, vmem_need = _choose_tiles(
        B, D_in, N_pad,
        jnp.dtype(x2d.dtype).itemsize,
        jnp.dtype(w_cat.dtype).itemsize,
        jnp.dtype(out_dtype).itemsize,
        num_cores,
    )

    grid_b = pl.cdiv(B, tb)
    grid_n = pl.cdiv(N_pad, tn)
    grid_k = D_in // tk  # tk divides D_in by construction

    # Single-buffer operands whose block index never changes over the grid
    # (halves the VMEM residency of a fully-resident W_cat).
    w_resident = (grid_n == 1 and grid_k == 1)
    b_resident = (grid_n == 1)

    def spec(shape, index_map, resident):
        if resident:
            return pl.BlockSpec(shape, index_map, pipeline_mode=pl.Buffered(1))
        return pl.BlockSpec(shape, index_map)

    cost = pl.CostEstimate(
        flops=2 * B * D_in * N_pad,
        transcendentals=0,
        bytes_accessed=(x2d.size * jnp.dtype(x2d.dtype).itemsize
                        + w_cat.size * jnp.dtype(w_cat.dtype).itemsize
                        + b_cat.size * jnp.dtype(b_cat.dtype).itemsize
                        + B * N_pad * jnp.dtype(out_dtype).itemsize),
    )

    vmem_limit = int(min(max(vmem_need * 2 + (1 << 20), 16 << 20), 48 << 20))

    return pl.pallas_call(
        _multihead_fused_kernel,
        out_shape=jax.ShapeDtypeStruct((B, N_pad), out_dtype),
        grid_spec=pltpu.PrefetchScalarGridSpec(
            num_scalar_prefetch=0,
            grid=(grid_b, grid_n, grid_k),
            in_specs=[
                pl.BlockSpec((tb, tk), lambda i, j, k: (i, k)),       # x batch/K tiles
                spec((tk, tn), lambda i, j, k: (k, j), w_resident),   # W tiles
                spec((1, tn), lambda i, j, k: (0, j), b_resident),    # bias tiles
            ],
            out_specs=pl.BlockSpec((tb, tn), lambda i, j, k: (i, j)),
            scratch_shapes=[pltpu.VMEM((tb, tn), jnp.float32)],
        ),
        compiler_params=pltpu.CompilerParams(
            dimension_semantics=("parallel", "parallel", "arbitrary"),
            vmem_limit_bytes=vmem_limit,
        ),
        cost_estimate=cost,
    )(x2d, w_cat, b_cat)


class MultiHeadPallas:
    """Mirror of ml_adp.nn.MultiHead for affine heads.

    Each head is either {"w": [D_in, D_out_k], "b": [D_out_k]} or None.
    __call__(x) -> (N_0(x), ..., N_K(x)), with None heads producing None.
    """
    # TODO(synk): only affine (Linear-like) heads are fused into the Pallas
    # kernel; arbitrary nn.Module heads would need their own kernels.

    def __init__(self, *heads, param_dtype=None, force_pallas=False,
                 min_pallas_flops=1 << 21):
        self.num_heads = len(heads)
        self.force_pallas = force_pallas
        self.min_pallas_flops = min_pallas_flops
        self.active = [(i, h) for i, h in enumerate(heads) if h is not None]
        self.w_cat = None
        self.b_cat = None
        self.slices = None
        if not self.active:
            return

        dtypes = {jnp.dtype(h["w"].dtype) for _, h in self.active}
        dtypes |= {jnp.dtype(h["b"].dtype) for _, h in self.active}
        if len(dtypes) != 1:
            raise ValueError("all heads must share a single parameter dtype")

        # Pad each head's output width up to a multiple of 128 lanes so all
        # stores are lane-dense and per-head slices start on lane boundaries.
        w_blocks, b_blocks, slices = [], [], []
        off = 0
        for _, h in self.active:
            d_in, d_out = h["w"].shape
            d_pad = _round_up(max(d_out, 1), _LANE)
            w = jnp.zeros((d_in, d_pad), h["w"].dtype).at[:, :d_out].set(h["w"])
            b = jnp.zeros((d_pad,), h["b"].dtype).at[:d_out].set(h["b"])
            w_blocks.append(w)
            b_blocks.append(b)
            slices.append((off, d_out))
            off += d_pad

        self.slices = slices
        self.w_cat = jnp.concatenate(w_blocks, axis=1)                   # [D_in, N_pad]
        if param_dtype is not None:                                      # e.g. bf16 MXU path
            self.w_cat = self.w_cat.astype(param_dtype)
        self.b_cat = jnp.concatenate(b_blocks, axis=0).reshape(1, -1).astype(jnp.float32)
        self.d_in = self.w_cat.shape[0]
        self.n_pad = self.w_cat.shape[1]

    def __call__(self, x):
        outputs = [None] * self.num_heads
        if not self.active:
            return tuple(outputs)

        lead = x.shape[:-1]
        x2d = x.reshape(-1, x.shape[-1])
        B = x2d.shape[0]

        flops = 2 * B * self.d_in * self.n_pad
        if self.force_pallas or flops >= self.min_pallas_flops:
            fused = multihead_fused(x2d, self.w_cat, self.b_cat)
        else:
            # Tiny problems are pure custom-call launch latency; plain XLA
            # dot is as fast or faster.
            fused = (jnp.dot(x2d.astype(self.w_cat.dtype), self.w_cat,
                             preferred_element_type=jnp.float32)
                     + self.b_cat).astype(x.dtype)

        for slot, (i, _) in enumerate(self.active):
            off, d_out = self.slices[slot]
            outputs[i] = fused[:, off:off + d_out].reshape(lead + (d_out,))
        return tuple(outputs)


if __name__ == "__main__":
    B, D_in = 8, 32
    key = jax.random.PRNGKey(0)
    kx, kw0, kb0, kw2, kb2 = jax.random.split(key, 5)

    x = jax.random.normal(kx, (B, D_in), dtype=jnp.float32)

    # Deterministic torch.nn.Linear-style uniform init.
    bound = 1.0 / (D_in ** 0.5)
    head0 = {
        "w": jax.random.uniform(kw0, (D_in, 16), jnp.float32, -bound, bound),
        "b": jax.random.uniform(kb0, (16,), jnp.float32, -bound, bound),
    }
    head2 = {
        "w": jax.random.uniform(kw2, (D_in, 8), jnp.float32, -bound, bound),
        "b": jax.random.uniform(kb2, (8,), jnp.float32, -bound, bound),
    }

    # force_pallas=True so the Pallas kernel is exercised even at demo size.
    model = MultiHeadPallas(head0, None, head2, force_pallas=True)
    outs = model(x)

    # Structure + value checks against a pure-JAX reference.
    assert outs[1] is None
    out0 = jax.block_until_ready(outs[0])
    out2 = jax.block_until_ready(outs[2])
    ref0 = x @ head0["w"] + head0["b"]
    ref2 = x @ head2["w"] + head2["b"]
    assert out0.shape == (B, 16) and out2.shape == (B, 8)
    assert jnp.allclose(out0, ref0, atol=1e-5)
    assert jnp.allclose(out2, ref2, atol=1e-5)

    # Also sanity-check the small-problem XLA fast path.
    model_fast = MultiHeadPallas(head0, None, head2)
    outs_fast = model_fast(x)
    assert outs_fast[1] is None
    assert jnp.allclose(jax.block_until_ready(outs_fast[0]), ref0, atol=1e-5)
    assert jnp.allclose(jax.block_until_ready(outs_fast[2]), ref2, atol=1e-5)

    print("KERNEL_OK")
</pallas_src>

<mosaic_0001>
module attributes {stable_mosaic.version = 11 : i64} {
  func.func @_multihead_fused_kernel(%arg0: i32, %arg1: i32, %arg2: i32, %arg3: memref<8x32xf32, #tpu.memory_space<vmem>>, %arg4: memref<32x256xf32, #tpu.memory_space<vmem>>, %arg5: memref<1x256xf32, #tpu.memory_space<vmem>>, %arg6: memref<8x256xf32, #tpu.memory_space<vmem>>, %arg7: memref<8x256xf32, #tpu.memory_space<vmem>>) attributes {dimension_semantics = [#tpu.dimension_semantics<parallel>, #tpu.dimension_semantics<parallel>, #tpu.dimension_semantics<arbitrary>], iteration_bounds = array<i64: 1, 1, 1>, scalar_prefetch = 0 : i64, scratch_operands = 1 : i64, tpu.core_type = #tpu.core_type<tc>, window_params = [{transform_indices = @transform_0, window_bounds = array<i64: 8, 32>}, {pipeline_mode = #tpu.pipeline_mode<synchronous>, transform_indices = @transform_1, window_bounds = array<i64: 32, 256>}, {pipeline_mode = #tpu.pipeline_mode<synchronous>, transform_indices = @transform_2, window_bounds = array<i64: 1, 256>}, {transform_indices = @transform_3, window_bounds = array<i64: 8, 256>}]} {
    %c0_i32 = arith.constant 0 : i32
    %0 = arith.cmpi eq, %arg2, %c0_i32 : i32
    %1 = arith.extui %0 : i1 to i32
    %c0_i32_0 = arith.constant 0 : i32
    %2 = arith.cmpi ne, %1, %c0_i32_0 : i32
    scf.if %2 {
      %cst_10 = arith.constant 0.000000e+00 : f32
      %12 = vector.broadcast %cst_10 : f32 to vector<8x256xf32>
      %c0_11 = arith.constant 0 : index
      %c0_12 = arith.constant 0 : index
      %13 = vector.load %arg7[%c0_11, %c0_12] : memref<8x256xf32, #tpu.memory_space<vmem>>, vector<8x256xf32>
      tpu.vector_store %arg7[%c0_11, %c0_12], %12 {strides = array<i32>} : memref<8x256xf32, #tpu.memory_space<vmem>>, vector<8x256xf32>,
    } else {
    }
    %c0 = arith.constant 0 : index
    %c0_1 = arith.constant 0 : index
    %3 = vector.load %arg3[%c0, %c0_1] : memref<8x32xf32, #tpu.memory_space<vmem>>, vector<8x32xf32>
    %c0_2 = arith.constant 0 : index
    %c0_3 = arith.constant 0 : index
    %4 = vector.load %arg4[%c0_2, %c0_3] : memref<32x256xf32, #tpu.memory_space<vmem>>, vector<32x256xf32>
    %c0_4 = arith.constant 0 : index
    %c0_5 = arith.constant 0 : index
    %5 = vector.load %arg7[%c0_4, %c0_5] : memref<8x256xf32, #tpu.memory_space<vmem>>, vector<8x256xf32>
    %cst = arith.constant dense<0.000000e+00> : vector<8x256xf32>
    %6 = tpu.matmul %3, %4, %cst {dimension_numbers = #tpu.dot_dimension_numbers<[1], [0], [0], [1], [0, 0, 1, 1], [], []>} : vector<8x32xf32>, vector<32x256xf32>, vector<8x256xf32> -> vector<8x256xf32>
    %7 = arith.addf %5, %6 : vector<8x256xf32>
    %c0_6 = arith.constant 0 : index
    %c0_7 = arith.constant 0 : index
    %8 = vector.load %arg7[%c0_6, %c0_7] : memref<8x256xf32, #tpu.memory_space<vmem>>, vector<8x256xf32>
    tpu.vector_store %arg7[%c0_6, %c0_7], %7 {strides = array<i32>} : memref<8x256xf32, #tpu.memory_space<vmem>>, vector<8x256xf32>,
    %c0_i32_8 = arith.constant 0 : i32
    %9 = arith.cmpi eq, %arg2, %c0_i32_8 : i32
    %10 = arith.extui %9 : i1 to i32
    %c0_i32_9 = arith.constant 0 : i32
    %11 = arith.cmpi ne, %10, %c0_i32_9 : i32
    scf.if %11 {
      %c0_10 = arith.constant 0 : index
      %c0_11 = arith.constant 0 : index
      %12 = vector.load %arg7[%c0_10, %c0_11] : memref<8x256xf32, #tpu.memory_space<vmem>>, vector<8x256xf32>
      %c0_12 = arith.constant 0 : index
      %c0_13 = arith.constant 0 : index
      %13 = vector.load %arg5[%c0_12, %c0_13] : memref<1x256xf32, #tpu.memory_space<vmem>>, vector<1x256xf32>
      %14 = vector.broadcast %13 : vector<1x256xf32> to vector<8x256xf32>
      %15 = arith.addf %12, %14 : vector<8x256xf32>
      %c0_14 = arith.constant 0 : index
      %c0_15 = arith.constant 0 : index
      %16 = vector.load %arg6[%c0_14, %c0_15] : memref<8x256xf32, #tpu.memory_space<vmem>>, vector<8x256xf32>
      tpu.vector_store %arg6[%c0_14, %c0_15], %15 {strides = array<i32>} : memref<8x256xf32, #tpu.memory_space<vmem>>, vector<8x256xf32>,
    } else {
    }
    return
  }
  func.func @transform_0(%arg0: i32, %arg1: i32, %arg2: i32) -> (i32, i32) {
    %c0_i32 = arith.constant 0 : i32
    return %arg0, %arg2 : i32, i32
  }
  func.func @transform_1(%arg0: i32, %arg1: i32, %arg2: i32) -> (i32, i32) {
    %c0_i32 = arith.constant 0 : i32
    return %arg2, %arg1 : i32, i32
  }
  func.func @transform_2(%arg0: i32, %arg1: i32, %arg2: i32) -> (i32, i32) {
    %c0_i32 = arith.constant 0 : i32
    %c0_i32_0 = arith.constant 0 : i32
    return %c0_i32, %arg1 : i32, i32
  }
  func.func @transform_3(%arg0: i32, %arg1: i32, %arg2: i32) -> (i32, i32) {
    %c0_i32 = arith.constant 0 : i32
    return %arg0, %arg1 : i32, i32
  }
}

</mosaic_0001>

<llo_original>
// kernel: tpu_custom_call.1
$region0: #{tpu_custom_call.1}
  #allocation0 [shape = 'u32[]', space=smem, size = 0x4, offset = 0x4, fixed_abs, tag = 'smem constant byte address 0x4 - core index']
  #allocation1 [shape = 'u32[144,128]{1,0:T(1,128)}', space=vmem, size = 0x12000, scoped, tag = 'internal scratch']
  #allocation2 [shape = 'f32[8,256]{1,0:T(8,128)}', space=vmem, size = 0x2000, scoped, tag = 'scratch operand']
  %s0 = inlined_call_operand.hbm [shape: f32[8,32], index: 0, kind: input, shape index: {}]
  %s1 = inlined_call_operand.hbm [shape: f32[32,256], index: 1, kind: input, shape index: {}]
  %s2 = inlined_call_operand.vmem [shape: f32[1,256], index: 2, kind: input, shape index: {}]
  %s3 = inlined_call_operand.hbm [shape: f32[8,256], index: 3, kind: output, shape index: {}]
  %s4 = sld [smem:[#allocation0]]
  $region38: #{tpu_custom_call.1} parent=0
    _
  %s6 = ssub.s32 1, %s4
  %s7 = scalar_select 0, %s6, %s4
  $region1: #{tpu_custom_call.1} parent=0
    #allocation3 [shape = 'u8[4096]{0}', space=vmem, size = 0x1000, scoped, tag = 'input window, operand 0, single buffered']
    #allocation4 [shape = 's32[1]{0}', space=sflag, size = 0x4, scoped, tag = 'scoped memory for tpu_custom_call.1']
    #allocation5 [shape = 's32[1]{0}', space=sflag, size = 0x4, scoped, tag = 'scoped memory for tpu_custom_call.1']
    #allocation6 [shape = 'u8[32768]{0}', space=vmem, size = 0x8000, scoped, tag = 'input window, operand 1, single buffered']
    #allocation7 [shape = 's32[1]{0}', space=sflag, size = 0x4, scoped, tag = 'scoped memory for tpu_custom_call.1']
    #allocation8 [shape = 'u8[8192]{0}', space=vmem, size = 0x2000, scoped, tag = 'output window, operand 0, single buffered']
    %8 = vsyncpa [#allocation4], 0
    %9 = vsyncpa [#allocation7], 0
    %10 = vsyncpa [#allocation5], 0
    // Predicated region
    $region2: #{tpu_custom_call.1} parent=1 // pred_check
      _
    $region3: #{tpu_custom_call.1} parent=1 // pred_check_branch
      %12 = sbr.rel (0) target = $region5
    $region4: #{tpu_custom_call.1} parent=1 // pred_region
      %s14 = ssub.s32 128, 128
      %15 = vsyncadd [#allocation4], %s14
      %s17 = sshll.u32 [#allocation3], 4
      %s18 = int_to_ptr.vmem [resolvable:$true] %s17
      %20 = dma.hbm_to_vmem [thread:$0]  %s0, 128, %s18, [#allocation4]
    $region5: #{tpu_custom_call.1} parent=1 // pred_fallthru
      _
    // Predicated region
    $region6: #{tpu_custom_call.1} parent=1 // pred_check
      _
    $region7: #{tpu_custom_call.1} parent=1 // pred_check_branch
      %22 = sbr.rel (0) target = $region9
    $region8: #{tpu_custom_call.1} parent=1 // pred_region
      %s24 = ssub.s32 1024, 1024
      %25 = vsyncadd [#allocation7], %s24
      %s26 = sshll.u32 [#allocation6], 4
      %s27 = int_to_ptr.vmem [resolvable:$true] %s26
      %32 = dma.hbm_to_vmem [thread:$0]  %s1, 1024, %s27, [#allocation7], 256, 256, 16
    $region9: #{tpu_custom_call.1} parent=1 // pred_fallthru
      _
    // Predicated region
    $region10: #{tpu_custom_call.1} parent=1 // pred_check
      _
    $region11: #{tpu_custom_call.1} parent=1 // pred_check_branch
      %34 = sbr.rel (0) target = $region13
    $region12: #{tpu_custom_call.1} parent=1 // pred_region
      _
    $region13: #{tpu_custom_call.1} parent=1 // pred_fallthru
      _
    // Predicated region
    $region14: #{tpu_custom_call.1} parent=1 // pred_check
      _
    $region15: #{tpu_custom_call.1} parent=1 // pred_check_branch
      %36 = sbr.rel (0) target = $region17
    $region16: #{tpu_custom_call.1} parent=1 // pred_region
      %37 = dma.done [#allocation4], 128
    $region17: #{tpu_custom_call.1} parent=1 // pred_fallthru
      _
    // Predicated region
    $region18: #{tpu_custom_call.1} parent=1 // pred_check
      _
    $region19: #{tpu_custom_call.1} parent=1 // pred_check_branch
      %39 = sbr.rel (0) target = $region21
    $region20: #{tpu_custom_call.1} parent=1 // pred_region
      %40 = dma.done [#allocation7], 1024
    $region21: #{tpu_custom_call.1} parent=1 // pred_fallthru
      _
    %p41 = scmp.eq.s32.totalorder 0, 0
    // Predicated region
    $region22: #{tpu_custom_call.1} parent=1 // pred_check
      %p42 = pneg %p41
    $region23: #{tpu_custom_call.1} parent=1 // pred_check_branch
      %44 = sbr.rel (%p42) target = $region25
    $region24: #{tpu_custom_call.1} parent=1 // pred_region
      %45 = vst [vmem:[#allocation2] sm:$0xff] 0.0
      %46 = vst [vmem:[#allocation2 + $0x8] sm:$0xff] 0.0
    $region25: #{tpu_custom_call.1} parent=1 // pred_fallthru
      _
    %v47 = vld [vmem:[#allocation3] sm:$0xff]
    %v48 = vld [vmem:[#allocation6] sm:$0xff]
    %v49 = vld [vmem:[#allocation6 + $0x8] sm:$0xff]
    %v50 = vld [vmem:[#allocation6 + $0x10] sm:$0xff]
    %v51 = vld [vmem:[#allocation6 + $0x18] sm:$0xff]
    %v52 = vld [vmem:[#allocation6 + $0x20] sm:$0xff]
    %v53 = vld [vmem:[#allocation6 + $0x28] sm:$0xff]
    %v54 = vld [vmem:[#allocation6 + $0x30] sm:$0xff]
    %v55 = vld [vmem:[#allocation6 + $0x38] sm:$0xff]
    %v56 = vld [vmem:[#allocation2] sm:$0xff]
    %v57 = vld [vmem:[#allocation2 + $0x8] sm:$0xff]
    %vm58 = vcmask 261120
    %v60 = vsel %vm58, %v47, 0
    %62 = vmatprep.subr.mxu0 %v49
    %63 = vmatpush1.msra.mxu0 %v48
    %64 = vmatprep.subr.mxu0 %v51
    %65 = vmatpush1.msra.mxu0 %v50
    %66 = vmatprep.subr.mxu0 %v53
    %67 = vmatpush1.msra.mxu0 %v52
    %68 = vmatprep.subr.mxu0 %v55
    %69 = vmatpush1.msra.mxu0 %v54
    %70 = vmatprep.subr.mxu0 0.0
    %71 = vmatpush1.msra.mxu0 0.0
    %72 = vmatprep.subr.mxu0 0.0
    %73 = vmatpush1.msra.mxu0 0.0
    %74 = vmatprep.subr.mxu0 0.0
    %75 = vmatpush1.msra.mxu0 0.0
    %76 = vmatprep.subr.mxu0 0.0
    %77 = vmatpush1.msra.mxu0 0.0
    %78 = vmatprep.subr.mxu0 0.0
    %79 = vmatpush1.msra.mxu0 0.0
    %80 = vmatprep.subr.mxu0 0.0
    %81 = vmatpush1.msra.mxu0 0.0
    %82 = vmatprep.subr.mxu0 0.0
    %83 = vmatpush1.msra.mxu0 0.0
    %84 = vmatprep.subr.mxu0 0.0
    %85 = vmatpush1.msra.mxu0 0.0
    %86 = vmatprep.subr.mxu0 0.0
    %87 = vmatpush1.msra.mxu0 0.0
    %88 = vmatprep.subr.mxu0 0.0
    %89 = vmatpush1.msra.mxu0 0.0
    %90 = vmatprep.subr.mxu0 0.0
    %91 = vmatpush1.msra.mxu0 0.0
    %92 = vmatprep.subr.mxu0 0.0
    %93 = vmatpush1.msra.mxu0 0.0
    %94 = vmatprep.subr.mxu0 0.0
    %95 = vmatpush1.msra.mxu0 0.0
    %96 = vmatprep.subr.mxu0 0.0
    %97 = vmatpush1.msra.mxu0 0.0
    %98 = vmatprep.subr.mxu0 0.0
    %99 = vmatpush1.msra.mxu0 0.0
    %100 = vmatprep.subr.mxu0 0.0
    %101 = vmatpush1.msra.mxu0 0.0
    %102 = vmatprep.subr.mxu0 0.0
    %103 = vmatpush1.msra.mxu0 0.0
    %104 = vmatprep.subr.mxu0 0.0
    %105 = vmatpush1.msra.mxu0 0.0
    %106 = vmatprep.subr.mxu0 0.0
    %107 = vmatpush1.msra.mxu0 0.0
    %108 = vmatprep.subr.mxu0 0.0
    %109 = vmatpush1.msra.mxu0 0.0
    %110 = vmatprep.subr.mxu0 0.0
    %111 = vmatpush1.msra.mxu0 0.0
    %112 = vmatprep.subr.mxu0 0.0
    %113 = vmatpush1.msra.mxu0 0.0
    %114 = vmatprep.subr.mxu0 0.0
    %115 = vmatpush1.msra.mxu0 0.0
    %116 = vmatprep.subr.mxu0 0.0
    %117 = vmatpush1.msra.mxu0 0.0
    %118 = vmatprep.subr.mxu0 0.0
    %119 = vmatpush1.msra.mxu0 0.0
    %120 = vmatprep.subr.mxu0 0.0
    %121 = vmatpush1.msra.mxu0 0.0
    %122 = vmatprep.subr.mxu0 0.0
    %123 = vmatpush1.msra.mxu0 0.0
    %124 = vmatprep.subr.mxu0 0.0
    %125 = vmatpush1.msra.mxu0 0.0
    %126 = vmatprep.mubr.f32.mxu0 0.0
    %127 = vmatmul.mubr.f32.gmra.mrb[0].mxu0 %v60
    %v128 = vpop.f32.mrb[0].mxu0
    %v129 = vadd.f32 0.0, %v128
    %v130 = vpop.f32.mrb[0].mxu0
    %v131 = vadd.f32 0.0, %v130
    %132 = vdwg.mxu0
    %v133 = vadd.f32 %v56, %v129
    %v134 = vadd.f32 %v57, %v131
    %135 = vst [vmem:[#allocation2] sm:$0xff] %v133
    %136 = vst [vmem:[#allocation2 + $0x8] sm:$0xff] %v134
    // Predicated region
    $region26: #{tpu_custom_call.1} parent=1 // pred_check
      %p137 = pneg %p41
    $region27: #{tpu_custom_call.1} parent=1 // pred_check_branch
      %139 = sbr.rel (%p137) target = $region29
    $region28: #{tpu_custom_call.1} parent=1 // pred_region
      %v140 = vld [vmem:[#allocation2] sm:$0xff]
      %v141 = vld [vmem:[#allocation2 + $0x8] sm:$0xff]
      %v142 = vld [vmem:[%s2] sm:$0x3]
      %v144 = vlaneseq
      %v145 = vshrl.u32 %v144, 7
      %v146 = vsub.s32 0, %v145
      %v147 = vrot.slane %v142, %v146
      %v148 = vlaneseq
      %v149 = vshrl.u32 %v148, 7
      %v150 = vsub.s32 1, %v149
      %v151 = vrot.slane %v142, %v150
      %v154 = vadd.f32 %v140, %v147
      %v155 = vadd.f32 %v141, %v151
      %156 = vst [vmem:[#allocation8] sm:$0xff] %v154
      %157 = vst [vmem:[#allocation8 + $0x8] sm:$0xff] %v155
    $region29: #{tpu_custom_call.1} parent=1 // pred_fallthru
      _
    // Predicated region
    $region30: #{tpu_custom_call.1} parent=1 // pred_check
      _
    $region31: #{tpu_custom_call.1} parent=1 // pred_check_branch
      %159 = sbr.rel (0) target = $region33
    $region32: #{tpu_custom_call.1} parent=1 // pred_region
      %s161 = ssub.s32 256, 256
      %162 = vsyncadd [#allocation5], %s161
      %s164 = sshll.u32 [#allocation8], 4
      %s165 = int_to_ptr.vmem [resolvable:$true] %s164
      %167 = dma.vmem_to_hbm [thread:$0]  %s165, 256, %s3, [#allocation5]
    $region33: #{tpu_custom_call.1} parent=1 // pred_fallthru
      _
    // Predicated region
    $region34: #{tpu_custom_call.1} parent=1 // pred_check
      _
    $region35: #{tpu_custom_call.1} parent=1 // pred_check_branch
      %169 = sbr.rel (0) target = $region37
    $region36: #{tpu_custom_call.1} parent=1 // pred_region
      %170 = dma.done [#allocation5], 256
    $region37: #{tpu_custom_call.1} parent=1 // pred_fallthru
      _
    %171 = vsyncpa [#allocation4], 1
    %172 = vsyncpa [#allocation7], 1
    %173 = vsyncpa [#allocation5], 1

</llo_original>
